<compile_context>
chip_gen: v6e
topology: v6e:2x2x1
jax: 0.10.0
libtpu: 0.0.40
codegen_flags: <defaults>
</compile_context>

<pallas_src>
import jax
import jax.numpy as jnp
from jax.experimental import pallas as pl
from jax.experimental.pallas import tpu as pltpu


def _make_kernel(C, RC, H, W):
    f32 = jnp.float32

    def kernel(x_ref, w1_ref, b1_ref, w3h_ref, w3v_ref, b3_ref, out_ref):
        # Single read of the feature map; compute in f32 in-register.
        x = x_ref[0].astype(f32)                                  # (C, H, W)

        # ---- directional encodings: mean + max over W (rows) / H (cols) ----
        row_enc = jnp.mean(x, axis=2) + jnp.max(x, axis=2)        # (C, H)
        col_enc = jnp.mean(x, axis=1) + jnp.max(x, axis=1)        # (C, W)

        # ---- conv_ks1 (1x1 conv = channel mixing) + ReLU6 ----
        # The 1x1 conv is position-wise, so applying it to the row / column
        # strips separately equals PyTorch's concat-then-conv.
        w1 = w1_ref[...]                                          # (RC, C)
        b1 = b1_ref[...]                                          # (RC, 1)

        def relu6(v):
            return jnp.minimum(jnp.maximum(v, 0.0), 6.0)

        hr = relu6(jnp.dot(w1, row_enc, preferred_element_type=f32) + b1)  # (RC, H)
        vr = relu6(jnp.dot(w1, col_enc, preferred_element_type=f32) + b1)  # (RC, W)

        # ---- conv_ks3 on width-1 / height-1 maps == 3-tap 1D convs ----
        # Stack the 3 zero-padded taps along channels and do one fused matmul
        # per direction; bias added once after.
        def taps(v, L):
            z = jnp.zeros((RC, 1), f32)
            vm1 = jnp.concatenate([z, v[:, :L - 1]], axis=1)      # value at p-1
            vp1 = jnp.concatenate([v[:, 1:], z], axis=1)          # value at p+1
            return jnp.concatenate([vm1, v, vp1], axis=0)         # (3*RC, L)

        b3 = b3_ref[...]                                          # (C, 1)
        hc = jnp.dot(w3h_ref[...], taps(hr, H),
                     preferred_element_type=f32) + b3             # (C, H)
        vc = jnp.dot(w3v_ref[...], taps(vr, W),
                     preferred_element_type=f32) + b3             # (C, W)

        # ---- mask[c,y,x] = sigmoid(hc[c,y] * vc[c,x]) ----
        # Broadcast hc along W and vc along H; no expansion constants needed.
        logits = hc[:, :, None] * vc[:, None, :]                  # (C, H, W)
        mask = 0.5 * jnp.tanh(0.5 * logits) + 0.5                 # exact sigmoid
        out_ref[0] = (mask * x).astype(out_ref.dtype)

    return kernel


def sha_layer(fea, params):
    """fea: (B, C, H, W).  params: conv1_w (RC,C,1,1), conv1_b (RC,),
    conv3_w (C,RC,3,3), conv3_b (C,).  Returns (B, C, H, W) in fea.dtype."""
    B, C, H, W = fea.shape
    w1 = params['conv1_w']
    b1 = params['conv1_b']
    w3 = params['conv3_w']
    b3 = params['conv3_b']
    RC = w1.shape[0]

    # A 3x3 kernel applied to a width-1 (height-1) map only sees its middle
    # column (row): stack the 3 taps along the input-channel axis.
    w3h = jnp.concatenate([w3[:, :, 0, 1], w3[:, :, 1, 1], w3[:, :, 2, 1]],
                          axis=1)                                  # (C, 3*RC)
    w3v = jnp.concatenate([w3[:, :, 1, 0], w3[:, :, 1, 1], w3[:, :, 1, 2]],
                          axis=1)                                  # (C, 3*RC)

    args = [
        fea,
        w1.reshape(RC, C).astype(jnp.float32),
        b1.reshape(RC, 1).astype(jnp.float32),
        w3h.astype(jnp.float32),
        w3v.astype(jnp.float32),
        b3.reshape(C, 1).astype(jnp.float32),
    ]

    def const_spec(a):
        nd = a.ndim
        return pl.BlockSpec(a.shape, lambda b, _nd=nd: (0,) * _nd)

    in_specs = [pl.BlockSpec((1, C, H, W), lambda b: (b, 0, 0, 0))] + \
               [const_spec(a) for a in args[1:]]

    # VMEM budget: (input + output) blocks, double-buffered, padded to TPU tiles.
    def rup(x, m):
        return (x + m - 1) // m * m

    esize = fea.dtype.itemsize
    blk_bytes = C * rup(H, 16) * rup(W, 128) * esize
    vmem_limit = int(min(100 * 2**20, max(32 * 2**20, 4 * blk_bytes + (4 << 20))))

    kernel = _make_kernel(C, RC, H, W)

    return pl.pallas_call(
        kernel,
        out_shape=jax.ShapeDtypeStruct((B, C, H, W), fea.dtype),
        grid_spec=pltpu.PrefetchScalarGridSpec(
            num_scalar_prefetch=0,
            grid=(B,),
            in_specs=in_specs,
            out_specs=pl.BlockSpec((1, C, H, W), lambda b: (b, 0, 0, 0)),
        ),
        compiler_params=pltpu.CompilerParams(
            dimension_semantics=("parallel",),   # v7x: one batch elem per TC
            vmem_limit_bytes=vmem_limit),
    )(*args)


# -------------------- pure-JAX reference (for validation) --------------------
def ref_forward(fea, p):
    HI = jax.lax.Precision.HIGHEST
    b, c, h, w = fea.shape

    def conv(v, wt, bias, pad):
        y = jax.lax.conv_general_dilated(
            v, wt, (1, 1), ((pad, pad), (pad, pad)),
            dimension_numbers=('NCHW', 'OIHW', 'NCHW'), precision=HI)
        return y + bias.reshape(1, -1, 1, 1)

    h_enc = jnp.mean(fea, axis=3, keepdims=True) + jnp.max(fea, axis=3, keepdims=True)
    v_enc = jnp.mean(fea, axis=2, keepdims=True) + jnp.max(fea, axis=2, keepdims=True)
    v_enc = v_enc.reshape(b, c, w, 1)
    enc = jnp.concatenate([h_enc, v_enc], axis=2)                  # (b, c, h+w, 1)
    enc = conv(enc, p['conv1_w'], p['conv1_b'], 0)
    enc = jnp.clip(enc, 0.0, 6.0)                                  # ReLU6
    rc = enc.shape[1]
    hs = enc[:, :, :h, :].reshape(b, rc, h, 1)
    vs = enc[:, :, h:, :].reshape(b, rc, 1, w)
    hc = conv(hs, p['conv3_w'], p['conv3_b'], 1)
    vc = conv(vs, p['conv3_w'], p['conv3_b'], 1)
    attn = jax.nn.sigmoid(hc * vc)
    return attn * fea


if __name__ == "__main__":
    B, C, H, W = 2, 8, 16, 16
    reduction = 4
    RC = C // reduction

    key = jax.random.PRNGKey(0)
    ks = jax.random.split(key, 5)

    def rnd(k, shape, s=0.1):
        return s * jax.random.normal(k, shape, jnp.float32)

    params = dict(
        conv1_w=rnd(ks[0], (RC, C, 1, 1)),
        conv1_b=rnd(ks[1], (RC,)),
        conv3_w=rnd(ks[2], (C, RC, 3, 3), s=0.3),
        conv3_b=rnd(ks[3], (C,)),
    )

    fea = jax.random.normal(ks[4], (B, C, H, W), jnp.float32)

    # f32 path (tight check against the conv reference).
    out = jax.block_until_ready(sha_layer(fea, params))
    ref = ref_forward(fea, params)
    if not jnp.allclose(out, ref, atol=5e-3, rtol=5e-3):
        raise SystemExit(
            f"f32 mismatch: max abs diff {float(jnp.max(jnp.abs(out - ref)))}")

    # bf16 HBM path (half the memory traffic on this bandwidth-bound kernel);
    # compare against the reference run on the same rounded input.
    fea_bf16 = fea.astype(jnp.bfloat16)
    out_bf16 = jax.block_until_ready(sha_layer(fea_bf16, params))
    ref_bf16 = ref_forward(fea_bf16.astype(jnp.float32), params)
    if not jnp.allclose(out_bf16.astype(jnp.float32), ref_bf16,
                        atol=5e-2, rtol=5e-2):
        raise SystemExit(
            "bf16 mismatch: max abs diff "
            f"{float(jnp.max(jnp.abs(out_bf16.astype(jnp.float32) - ref_bf16)))}")

    print("KERNEL_OK")
</pallas_src>

<mosaic_0001>
module attributes {stable_mosaic.version = 11 : i64} {
  func.func @kernel(%arg0: i32, %arg1: memref<1x8x16x16xf32, #tpu.memory_space<vmem>>, %arg2: memref<2x8xf32, #tpu.memory_space<vmem>>, %arg3: memref<2x1xf32, #tpu.memory_space<vmem>>, %arg4: memref<8x6xf32, #tpu.memory_space<vmem>>, %arg5: memref<8x6xf32, #tpu.memory_space<vmem>>, %arg6: memref<8x1xf32, #tpu.memory_space<vmem>>, %arg7: memref<1x8x16x16xf32, #tpu.memory_space<vmem>>) attributes {dimension_semantics = [#tpu.dimension_semantics<parallel>], iteration_bounds = array<i64: 2>, scalar_prefetch = 0 : i64, scratch_operands = 0 : i64, tpu.core_type = #tpu.core_type<tc>, window_params = [{transform_indices = @transform_0, window_bounds = array<i64: 1, 8, 16, 16>}, {pipeline_mode = #tpu.pipeline_mode<synchronous>, transform_indices = @transform_1, window_bounds = array<i64: 2, 8>}, {pipeline_mode = #tpu.pipeline_mode<synchronous>, transform_indices = @transform_2, window_bounds = array<i64: 2, 1>}, {pipeline_mode = #tpu.pipeline_mode<synchronous>, transform_indices = @transform_3, window_bounds = array<i64: 8, 6>}, {pipeline_mode = #tpu.pipeline_mode<synchronous>, transform_indices = @transform_4, window_bounds = array<i64: 8, 6>}, {pipeline_mode = #tpu.pipeline_mode<synchronous>, transform_indices = @transform_5, window_bounds = array<i64: 8, 1>}, {transform_indices = @transform_6, window_bounds = array<i64: 1, 8, 16, 16>}]} {
    %c0 = arith.constant 0 : index
    %c0_0 = arith.constant 0 : index
    %c0_1 = arith.constant 0 : index
    %c0_2 = arith.constant 0 : index
    %0 = vector.load %arg1[%c0, %c0_0, %c0_1, %c0_2] : memref<1x8x16x16xf32, #tpu.memory_space<vmem>>, vector<1x8x16x16xf32>
    %1 = vector.shape_cast %0 : vector<1x8x16x16xf32> to vector<8x16x16xf32>
    %cst = arith.constant dense<0.000000e+00> : vector<8x16xf32>
    %2 = vector.multi_reduction <add>, %1, %cst [2] : vector<8x16x16xf32> to vector<8x16xf32>
    %cst_3 = arith.constant 1.600000e+01 : f32
    %3 = vector.broadcast %cst_3 : f32 to vector<8x16xf32>
    %4 = arith.divf %2, %3 : vector<8x16xf32>
    %cst_4 = arith.constant dense<0xFF800000> : vector<8x16xf32>
    %5 = vector.multi_reduction <maximumf>, %1, %cst_4 [2] : vector<8x16x16xf32> to vector<8x16xf32>
    %6 = arith.addf %4, %5 : vector<8x16xf32>
    %cst_5 = arith.constant dense<0.000000e+00> : vector<8x16xf32>
    %7 = vector.multi_reduction <add>, %1, %cst_5 [1] : vector<8x16x16xf32> to vector<8x16xf32>
    %cst_6 = arith.constant 1.600000e+01 : f32
    %8 = vector.broadcast %cst_6 : f32 to vector<8x16xf32>
    %9 = arith.divf %7, %8 : vector<8x16xf32>
    %cst_7 = arith.constant dense<0xFF800000> : vector<8x16xf32>
    %10 = vector.multi_reduction <maximumf>, %1, %cst_7 [1] : vector<8x16x16xf32> to vector<8x16xf32>
    %11 = arith.addf %9, %10 : vector<8x16xf32>
    %c0_8 = arith.constant 0 : index
    %c0_9 = arith.constant 0 : index
    %12 = vector.load %arg2[%c0_8, %c0_9] : memref<2x8xf32, #tpu.memory_space<vmem>>, vector<2x8xf32>
    %c0_10 = arith.constant 0 : index
    %c0_11 = arith.constant 0 : index
    %13 = vector.load %arg3[%c0_10, %c0_11] : memref<2x1xf32, #tpu.memory_space<vmem>>, vector<2x1xf32>
    %cst_12 = arith.constant dense<0.000000e+00> : vector<2x16xf32>
    %14 = tpu.matmul %12, %6, %cst_12 {dimension_numbers = #tpu.dot_dimension_numbers<[1], [0], [0], [1], [0, 0, 1, 1], [], []>} : vector<2x8xf32>, vector<8x16xf32>, vector<2x16xf32> -> vector<2x16xf32>
    %15 = vector.broadcast %13 : vector<2x1xf32> to vector<2x16xf32>
    %16 = arith.addf %14, %15 : vector<2x16xf32>
    %cst_13 = arith.constant 0.000000e+00 : f32
    %17 = vector.broadcast %cst_13 : f32 to vector<2x16xf32>
    %18 = arith.maximumf %16, %17 : vector<2x16xf32>
    %cst_14 = arith.constant 6.000000e+00 : f32
    %19 = vector.broadcast %cst_14 : f32 to vector<2x16xf32>
    %20 = arith.minimumf %18, %19 : vector<2x16xf32>
    %cst_15 = arith.constant dense<0.000000e+00> : vector<2x16xf32>
    %21 = tpu.matmul %12, %11, %cst_15 {dimension_numbers = #tpu.dot_dimension_numbers<[1], [0], [0], [1], [0, 0, 1, 1], [], []>} : vector<2x8xf32>, vector<8x16xf32>, vector<2x16xf32> -> vector<2x16xf32>
    %22 = vector.broadcast %13 : vector<2x1xf32> to vector<2x16xf32>
    %23 = arith.addf %21, %22 : vector<2x16xf32>
    %cst_16 = arith.constant 0.000000e+00 : f32
    %24 = vector.broadcast %cst_16 : f32 to vector<2x16xf32>
    %25 = arith.maximumf %23, %24 : vector<2x16xf32>
    %cst_17 = arith.constant 6.000000e+00 : f32
    %26 = vector.broadcast %cst_17 : f32 to vector<2x16xf32>
    %27 = arith.minimumf %25, %26 : vector<2x16xf32>
    %c0_18 = arith.constant 0 : index
    %c0_19 = arith.constant 0 : index
    %28 = vector.load %arg6[%c0_18, %c0_19] : memref<8x1xf32, #tpu.memory_space<vmem>>, vector<8x1xf32>
    %c0_20 = arith.constant 0 : index
    %c0_21 = arith.constant 0 : index
    %29 = vector.load %arg4[%c0_20, %c0_21] : memref<8x6xf32, #tpu.memory_space<vmem>>, vector<8x6xf32>
    %cst_22 = arith.constant 0.000000e+00 : f32
    %30 = vector.broadcast %cst_22 : f32 to vector<2x1xf32>
    %31 = vector.extract_strided_slice %20 {offsets = [0, 0], sizes = [2, 15], strides = [1, 1]} : vector<2x16xf32> to vector<2x15xf32>
    %32 = tpu.concatenate %30, %31 in 1 : vector<2x1xf32>, vector<2x15xf32> -> vector<2x16xf32>
    %33 = vector.extract_strided_slice %20 {offsets = [0, 1], sizes = [2, 15], strides = [1, 1]} : vector<2x16xf32> to vector<2x15xf32>
    %34 = tpu.concatenate %33, %30 in 1 : vector<2x15xf32>, vector<2x1xf32> -> vector<2x16xf32>
    %35 = tpu.concatenate %32, %20, %34 in 0 : vector<2x16xf32>, vector<2x16xf32>, vector<2x16xf32> -> vector<6x16xf32>
    %cst_23 = arith.constant dense<0.000000e+00> : vector<8x16xf32>
    %36 = tpu.matmul %29, %35, %cst_23 {dimension_numbers = #tpu.dot_dimension_numbers<[1], [0], [0], [1], [0, 0, 1, 1], [], []>} : vector<8x6xf32>, vector<6x16xf32>, vector<8x16xf32> -> vector<8x16xf32>
    %37 = vector.broadcast %28 : vector<8x1xf32> to vector<8x16xf32>
    %38 = arith.addf %36, %37 : vector<8x16xf32>
    %c0_24 = arith.constant 0 : index
    %c0_25 = arith.constant 0 : index
    %39 = vector.load %arg5[%c0_24, %c0_25] : memref<8x6xf32, #tpu.memory_space<vmem>>, vector<8x6xf32>
    %cst_26 = arith.constant 0.000000e+00 : f32
    %40 = vector.broadcast %cst_26 : f32 to vector<2x1xf32>
    %41 = vector.extract_strided_slice %27 {offsets = [0, 0], sizes = [2, 15], strides = [1, 1]} : vector<2x16xf32> to vector<2x15xf32>
    %42 = tpu.concatenate %40, %41 in 1 : vector<2x1xf32>, vector<2x15xf32> -> vector<2x16xf32>
    %43 = vector.extract_strided_slice %27 {offsets = [0, 1], sizes = [2, 15], strides = [1, 1]} : vector<2x16xf32> to vector<2x15xf32>
    %44 = tpu.concatenate %43, %40 in 1 : vector<2x15xf32>, vector<2x1xf32> -> vector<2x16xf32>
    %45 = tpu.concatenate %42, %27, %44 in 0 : vector<2x16xf32>, vector<2x16xf32>, vector<2x16xf32> -> vector<6x16xf32>
    %cst_27 = arith.constant dense<0.000000e+00> : vector<8x16xf32>
    %46 = tpu.matmul %39, %45, %cst_27 {dimension_numbers = #tpu.dot_dimension_numbers<[1], [0], [0], [1], [0, 0, 1, 1], [], []>} : vector<8x6xf32>, vector<6x16xf32>, vector<8x16xf32> -> vector<8x16xf32>
    %47 = vector.broadcast %28 : vector<8x1xf32> to vector<8x16xf32>
    %48 = arith.addf %46, %47 : vector<8x16xf32>
    %49 = vector.shape_cast %38 : vector<8x16xf32> to vector<8x16x1xf32>
    %50 = vector.shape_cast %48 : vector<8x16xf32> to vector<8x1x16xf32>
    %51 = vector.broadcast %49 : vector<8x16x1xf32> to vector<8x16x16xf32>
    %52 = vector.broadcast %50 : vector<8x1x16xf32> to vector<8x16x16xf32>
    %53 = arith.mulf %51, %52 : vector<8x16x16xf32>
    %cst_28 = arith.constant 5.000000e-01 : f32
    %54 = vector.broadcast %cst_28 : f32 to vector<8x16x16xf32>
    %55 = arith.mulf %54, %53 : vector<8x16x16xf32>
    %56 = math.tanh %55 : vector<8x16x16xf32>
    %cst_29 = arith.constant 5.000000e-01 : f32
    %57 = vector.broadcast %cst_29 : f32 to vector<8x16x16xf32>
    %58 = arith.mulf %57, %56 : vector<8x16x16xf32>
    %cst_30 = arith.constant 5.000000e-01 : f32
    %59 = vector.broadcast %cst_30 : f32 to vector<8x16x16xf32>
    %60 = arith.addf %58, %59 : vector<8x16x16xf32>
    %61 = arith.mulf %60, %1 : vector<8x16x16xf32>
    %c0_31 = arith.constant 0 : index
    %c0_32 = arith.constant 0 : index
    %c0_33 = arith.constant 0 : index
    %c0_34 = arith.constant 0 : index
    %62 = vector.load %arg7[%c0_31, %c0_32, %c0_33, %c0_34] : memref<1x8x16x16xf32, #tpu.memory_space<vmem>>, vector<1x8x16x16xf32>
    %63 = vector.shape_cast %62 : vector<1x8x16x16xf32> to vector<8x16x16xf32>
    %64 = vector.shape_cast %61 : vector<8x16x16xf32> to vector<1x8x16x16xf32>
    tpu.vector_store %arg7[%c0_31, %c0_32, %c0_33, %c0_34], %64 {strides = array<i32>} : memref<1x8x16x16xf32, #tpu.memory_space<vmem>>, vector<1x8x16x16xf32>,
    return
  }
  func.func @transform_0(%arg0: i32) -> (i32, i32, i32, i32) {
    %c0_i32 = arith.constant 0 : i32
    %c0_i32_0 = arith.constant 0 : i32
    %c0_i32_1 = arith.constant 0 : i32
    %c0_i32_2 = arith.constant 0 : i32
    return %arg0, %c0_i32, %c0_i32_0, %c0_i32_1 : i32, i32, i32, i32
  }
  func.func @transform_1(%arg0: i32) -> (i32, i32) {
    %c0_i32 = arith.constant 0 : i32
    %c0_i32_0 = arith.constant 0 : i32
    %c0_i32_1 = arith.constant 0 : i32
    return %c0_i32, %c0_i32_0 : i32, i32
  }
  func.func @transform_2(%arg0: i32) -> (i32, i32) {
    %c0_i32 = arith.constant 0 : i32
    %c0_i32_0 = arith.constant 0 : i32
    %c0_i32_1 = arith.constant 0 : i32
    return %c0_i32, %c0_i32_0 : i32, i32
  }
  func.func @transform_3(%arg0: i32) -> (i32, i32) {
    %c0_i32 = arith.constant 0 : i32
    %c0_i32_0 = arith.constant 0 : i32
    %c0_i32_1 = arith.constant 0 : i32
    return %c0_i32, %c0_i32_0 : i32, i32
  }
  func.func @transform_4(%arg0: i32) -> (i32, i32) {
    %c0_i32 = arith.constant 0 : i32
    %c0_i32_0 = arith.constant 0 : i32
    %c0_i32_1 = arith.constant 0 : i32
    return %c0_i32, %c0_i32_0 : i32, i32
  }
  func.func @transform_5(%arg0: i32) -> (i32, i32) {
    %c0_i32 = arith.constant 0 : i32
    %c0_i32_0 = arith.constant 0 : i32
    %c0_i32_1 = arith.constant 0 : i32
    return %c0_i32, %c0_i32_0 : i32, i32
  }
  func.func @transform_6(%arg0: i32) -> (i32, i32, i32, i32) {
    %c0_i32 = arith.constant 0 : i32
    %c0_i32_0 = arith.constant 0 : i32
    %c0_i32_1 = arith.constant 0 : i32
    %c0_i32_2 = arith.constant 0 : i32
    return %arg0, %c0_i32, %c0_i32_0, %c0_i32_1 : i32, i32, i32, i32
  }
}

</mosaic_0001>

<llo_original>
// kernel: tpu_custom_call.1
$region0: #{tpu_custom_call.1}
  #allocation0 [shape = 'u32[]', space=smem, size = 0x4, offset = 0x4, fixed_abs, tag = 'smem constant byte address 0x4 - core index']
  #allocation1 [shape = 'u32[144,128]{1,0:T(1,128)}', space=vmem, size = 0x12000, scoped, tag = 'internal scratch']
  %s0 = inlined_call_operand.hbm [shape: f32[2,8,16,16], index: 0, kind: input, shape index: {}]
  %s1 = inlined_call_operand.hbm [shape: f32[2,8], index: 1, kind: input, shape index: {}]
  %s2 = inlined_call_operand.vmem [shape: f32[2,1], index: 2, kind: input, shape index: {}]
  %s3 = inlined_call_operand.vmem [shape: f32[8,6], index: 3, kind: input, shape index: {}]
  %s4 = inlined_call_operand.vmem [shape: f32[8,6], index: 4, kind: input, shape index: {}]
  %s5 = inlined_call_operand.vmem [shape: f32[8,1], index: 5, kind: input, shape index: {}]
  %s6 = inlined_call_operand.hbm [shape: f32[2,8,16,16], index: 6, kind: output, shape index: {}]
  %s7 = sld [smem:[#allocation0]]
  $region65: #{tpu_custom_call.1} parent=0
    _
  %s9 = ssub.s32 1, %s7
  %s10 = scalar_select 0, %s9, %s7
  $region1: #{tpu_custom_call.1} parent=0
    #allocation2 [shape = 'u8[131072]{0}', space=vmem, size = 0x20000, scoped, tag = 'input window, operand 0']
    #allocation3 [shape = 's32[2]{0}', space=sflag, size = 0x8, scoped, tag = 'scoped memory for tpu_custom_call.1']
    #allocation4 [shape = 's32[2]{0}', space=sflag, size = 0x8, scoped, tag = 'scoped memory for tpu_custom_call.1']
    #allocation5 [shape = 'u8[1024]{0}', space=vmem, size = 0x400, scoped, tag = 'input window, operand 1, single buffered']
    #allocation6 [shape = 's32[1]{0}', space=sflag, size = 0x4, scoped, tag = 'scoped memory for tpu_custom_call.1']
    #allocation7 [shape = 'u8[131072]{0}', space=vmem, size = 0x20000, scoped, tag = 'output window, operand 0']
    %11 = vsyncpa [#allocation3], 0
    %s12 = scalar_lea.sflag [#allocation3], 1
    %13 = vsyncpa %s12, 0
    %14 = vsyncpa [#allocation6], 0
    %15 = vsyncpa [#allocation4], 0
    %s16 = scalar_lea.sflag [#allocation4], 1
    %17 = vsyncpa %s16, 0
    loop: start=0, step=1, limit=4
    $region2: #{tpu_custom_call.1} parent=1 // loop_pre_header
      _
    $region3: #{tpu_custom_call.1} parent=1 // loop_header
      %s19 = sphi 0, %s23
      %p20 = scmp.ge.s32.totalorder %s19, 4
      %s29 = sphi 0, %s31
      %s32 = sphi 0, %s29
      %s33 = sphi 0, %s32
      %s49 = sphi 0, %s33
      %s53 = sphi 0, %s53
      %s55 = sphi 0, %s53
      %s56 = sphi 0, %s55
      %s70 = sphi 0, %s56
      %s74 = sphi 0, %s74
      %s76 = sphi 0, %s74
      %s77 = sphi 0, %s76
      %s91 = sphi 0, %s77
      %s95 = sphi 0, %s95
      %s97 = sphi 0, %s95
      %s98 = sphi 0, %s97
      %s112 = sphi 0, %s98
      %s116 = sphi 0, %s116
      %s118 = sphi 0, %s116
      %s119 = sphi 0, %s118
      %s133 = sphi 0, %s119
      %s137 = sphi 0, %s137
      %s139 = sphi 0, %s137
      %s140 = sphi 0, %s139
      %s154 = sphi 0, %s140
      %s160 = sphi 0, %s162
      %s163 = sphi 0, %s160
      %s164 = sphi 0, %s163
      %s180 = sphi 0, %s164
    $region4: #{tpu_custom_call.1} parent=1 // loop_header_branch
      %22 = sbr.rel (%p20) target = $region8
    $region5: #{tpu_custom_call.1} parent=1 // loop_body
      %s24 = ssub.s32 %s19, 1
      %s25 = ssub.s32 %s19, 2
      %s26 = sadd.s32 %s19, 1
      %s27 = ssub.s32 %s19, %s26
      %p28 = scmp.eq.s32.totalorder %s27, 0
      %s30 = sadd.s32 %s29, 1
      %s31 = scalar_select %p28, %s29, %s30
      %p34 = pneg %p28
      %p35 = scmp.eq.s32.totalorder %s19, 1
      %p36 = por %p34, %p35
      %p37 = scmp.ne.s32.totalorder %s29, %s32
      %p38 = scmp.eq.s32.totalorder %s19, 0
      %p39 = por %p37, %p38
      %p40 = scmp.ne.s32.totalorder %s29, %s32
      %p41 = scmp.eq.s32.totalorder %s24, 1
      %p42 = por %p40, %p41
      %p43 = scmp.ne.s32.totalorder %s32, %s33
      %p44 = scmp.eq.s32.totalorder %s24, 0
      %p45 = por %p43, %p44
      %p46 = scmp.ne.s32.totalorder %s32, %s33
      %p47 = scmp.eq.s32.totalorder %s25, 1
      %p48 = por %p46, %p47
      %p50 = scmp.ne.s32.totalorder %s33, %s49
      %p51 = scmp.eq.s32.totalorder %s25, 0
      %p52 = por %p50, %p51
      %s54 = sadd.s32 %s53, 1
      %p57 = scmp.eq.s32.totalorder %s19, 1
      %p58 = scmp.ne.s32.totalorder %s53, %s55
      %p59 = scmp.eq.s32.totalorder %s19, 0
      %p60 = por %p58, %p59
      %p61 = scmp.ne.s32.totalorder %s53, %s55
      %p62 = scmp.eq.s32.totalorder %s24, 1
      %p63 = por %p61, %p62
      %p64 = scmp.ne.s32.totalorder %s55, %s56
      %p65 = scmp.eq.s32.totalorder %s24, 0
      %p66 = por %p64, %p65
      %p67 = scmp.ne.s32.totalorder %s55, %s56
      %p68 = scmp.eq.s32.totalorder %s25, 1
      %p69 = por %p67, %p68
      %p71 = scmp.ne.s32.totalorder %s56, %s70
      %p72 = scmp.eq.s32.totalorder %s25, 0
      %p73 = por %p71, %p72
      %s75 = sadd.s32 %s74, 1
      %p78 = scmp.eq.s32.totalorder %s19, 1
      %p79 = scmp.ne.s32.totalorder %s74, %s76
      %p80 = scmp.eq.s32.totalorder %s19, 0
      %p81 = por %p79, %p80
      %p82 = scmp.ne.s32.totalorder %s74, %s76
      %p83 = scmp.eq.s32.totalorder %s24, 1
      %p84 = por %p82, %p83
      %p85 = scmp.ne.s32.totalorder %s76, %s77
      %p86 = scmp.eq.s32.totalorder %s24, 0
      %p87 = por %p85, %p86
      %p88 = scmp.ne.s32.totalorder %s76, %s77
      %p89 = scmp.eq.s32.totalorder %s25, 1
      %p90 = por %p88, %p89
      %p92 = scmp.ne.s32.totalorder %s77, %s91
      %p93 = scmp.eq.s32.totalorder %s25, 0
      %p94 = por %p92, %p93
      %s96 = sadd.s32 %s95, 1
      %p99 = scmp.eq.s32.totalorder %s19, 1
      %p100 = scmp.ne.s32.totalorder %s95, %s97
      %p101 = scmp.eq.s32.totalorder %s19, 0
      %p102 = por %p100, %p101
      %p103 = scmp.ne.s32.totalorder %s95, %s97
      %p104 = scmp.eq.s32.totalorder %s24, 1
      %p105 = por %p103, %p104
      %p106 = scmp.ne.s32.totalorder %s97, %s98
      %p107 = scmp.eq.s32.totalorder %s24, 0
      %p108 = por %p106, %p107
      %p109 = scmp.ne.s32.totalorder %s97, %s98
      %p110 = scmp.eq.s32.totalorder %s25, 1
      %p111 = por %p109, %p110
      %p113 = scmp.ne.s32.totalorder %s98, %s112
      %p114 = scmp.eq.s32.totalorder %s25, 0
      %p115 = por %p113, %p114
      %s117 = sadd.s32 %s116, 1
      %p120 = scmp.eq.s32.totalorder %s19, 1
      %p121 = scmp.ne.s32.totalorder %s116, %s118
      %p122 = scmp.eq.s32.totalorder %s19, 0
      %p123 = por %p121, %p122
      %p124 = scmp.ne.s32.totalorder %s116, %s118
      %p125 = scmp.eq.s32.totalorder %s24, 1
      %p126 = por %p124, %p125
      %p127 = scmp.ne.s32.totalorder %s118, %s119
      %p128 = scmp.eq.s32.totalorder %s24, 0
      %p129 = por %p127, %p128
      %p130 = scmp.ne.s32.totalorder %s118, %s119
      %p131 = scmp.eq.s32.totalorder %s25, 1
      %p132 = por %p130, %p131
      %p134 = scmp.ne.s32.totalorder %s119, %s133
      %p135 = scmp.eq.s32.totalorder %s25, 0
      %p136 = por %p134, %p135
      %s138 = sadd.s32 %s137, 1
      %p141 = scmp.eq.s32.totalorder %s19, 1
      %p142 = scmp.ne.s32.totalorder %s137, %s139
      %p143 = scmp.eq.s32.totalorder %s19, 0
      %p144 = por %p142, %p143
      %p145 = scmp.ne.s32.totalorder %s137, %s139
      %p146 = scmp.eq.s32.totalorder %s24, 1
      %p147 = por %p145, %p146
      %p148 = scmp.ne.s32.totalorder %s139, %s140
      %p149 = scmp.eq.s32.totalorder %s24, 0
      %p150 = por %p148, %p149
      %p151 = scmp.ne.s32.totalorder %s139, %s140
      %p152 = scmp.eq.s32.totalorder %s25, 1
      %p153 = por %p151, %p152
      %p155 = scmp.ne.s32.totalorder %s140, %s154
      %p156 = scmp.eq.s32.totalorder %s25, 0
      %p157 = por %p155, %p156
      %s158 = ssub.s32 %s19, %s26
      %p159 = scmp.eq.s32.totalorder %s158, 0
      %s161 = sadd.s32 %s160, 1
      %s162 = scalar_select %p159, %s160, %s161
      %p165 = pneg %p159
      %p166 = scmp.eq.s32.totalorder %s19, 1
      %p167 = por %p165, %p166
      %p168 = scmp.ne.s32.totalorder %s160, %s163
      %p169 = scmp.eq.s32.totalorder %s19, 0
      %p170 = por %p168, %p169
      %p171 = scmp.ne.s32.totalorder %s160, %s163
      %p172 = scmp.eq.s32.totalorder %s24, 1
      %p173 = por %p171, %p172
      %p174 = scmp.ne.s32.totalorder %s163, %s164
      %p175 = scmp.eq.s32.totalorder %s24, 0
      %p176 = por %p174, %p175
      %p177 = scmp.ne.s32.totalorder %s163, %s164
      %p178 = scmp.eq.s32.totalorder %s25, 1
      %p179 = por %p177, %p178
      %p181 = scmp.ne.s32.totalorder %s164, %s180
      %p182 = scmp.eq.s32.totalorder %s25, 0
      %p183 = por %p181, %p182
      %p184 = scmp.le.s32.totalorder 1, %s19
      %p185 = scmp.lt.s32.totalorder %s19, 3
      %p186 = pnand %p184, %p185
      %p187 = pneg %p186
      // Predicated region
      $region9: #{tpu_custom_call.1} parent=5 // pred_check
        _
      $region10: #{tpu_custom_call.1} parent=5 // pred_check_branch
        %189 = sbr.rel (%p186) target = $region12
      $region11: #{tpu_custom_call.1} parent=5 // pred_region
        %s190 = ssub.s32 %s19, 1
        // Predicated region
        $region13: #{tpu_custom_call.1} parent=11 // pred_check
          %p191 = pneg %p66
        $region14: #{tpu_custom_call.1} parent=11 // pred_check_branch
          %193 = sbr.rel (%p191) target = $region16
        $region15: #{tpu_custom_call.1} parent=11 // pred_region
          %s195 = ssub.s32 32, 32
          %196 = vsyncadd [#allocation6], %s195
          %s198 = sshll.u32 [#allocation5], 4
          %s199 = int_to_ptr.vmem [resolvable:$true] %s198
          %201 = dma.hbm_to_vmem [thread:$0]  %s1, 32, %s199, [#allocation6]
        $region16: #{tpu_custom_call.1} parent=11 // pred_fallthru
          _
        // Predicated region
        $region17: #{tpu_custom_call.1} parent=11 // pred_check
          %p202 = pneg %p87
        $region18: #{tpu_custom_call.1} parent=11 // pred_check_branch
          %204 = sbr.rel (%p202) target = $region20
        $region19: #{tpu_custom_call.1} parent=11 // pred_region
          _
        $region20: #{tpu_custom_call.1} parent=11 // pred_fallthru
          _
        // Predicated region
        $region21: #{tpu_custom_call.1} parent=11 // pred_check
          %p205 = pneg %p108
        $region22: #{tpu_custom_call.1} parent=11 // pred_check_branch
          %207 = sbr.rel (%p205) target = $region24
        $region23: #{tpu_custom_call.1} parent=11 // pred_region
          _
        $region24: #{tpu_custom_call.1} parent=11 // pred_fallthru
          _
        // Predicated region
        $region25: #{tpu_custom_call.1} parent=11 // pred_check
          %p208 = pneg %p129
        $region26: #{tpu_custom_call.1} parent=11 // pred_check_branch
          %210 = sbr.rel (%p208) target = $region28
        $region27: #{tpu_custom_call.1} parent=11 // pred_region
          _
        $region28: #{tpu_custom_call.1} parent=11 // pred_fallthru
          _
        // Predicated region
        $region29: #{tpu_custom_call.1} parent=11 // pred_check
          %p211 = pneg %p150
        $region30: #{tpu_custom_call.1} parent=11 // pred_check_branch
          %213 = sbr.rel (%p211) target = $region32
        $region31: #{tpu_custom_call.1} parent=11 // pred_region
          _
        $region32: #{tpu_custom_call.1} parent=11 // pred_fallthru
          _
      $region12: #{tpu_custom_call.1} parent=5 // pred_fallthru
        _
      %p214 = scmp.lt.s32.totalorder %s19, 2
      // Predicated region
      $region33: #{tpu_custom_call.1} parent=5 // pred_check
        %p215 = pneg %p214
      $region34: #{tpu_custom_call.1} parent=5 // pred_check_branch
        %217 = sbr.rel (%p215) target = $region36
      $region35: #{tpu_custom_call.1} parent=5 // pred_region
        // Predicated region
        $region37: #{tpu_custom_call.1} parent=35 // pred_check
          %p218 = pneg %p39
        $region38: #{tpu_custom_call.1} parent=35 // pred_check_branch
          %220 = sbr.rel (%p218) target = $region40
        $region39: #{tpu_custom_call.1} parent=35 // pred_region
          %s221 = sand.u32 %s29, 1
          %s222 = scalar_lea.sflag [#allocation3], %s221
          %s223 = sand.u32 %s29, 1
          %s224 = smul.addr %s223, 128
          %s225 = scalar_lea.vmem [#allocation2], %s224
          %s227 = ssub.s32 2048, 2048
          %228 = vsyncadd %s222, %s227
          %s229 = smul.addr %s19, 16
          %s230 = smul.addr %s229, 128
          %s231 = scalar_lea.hbm %s0, %s230
          %s232 = sshll.u32 %s225, 4
          %s233 = int_to_ptr.vmem [resolvable:$true] %s232
          %238 = dma.hbm_to_vmem [thread:$0]  %s231, 2048, %s233, %s222, 128, 128, 8
        $region40: #{tpu_custom_call.1} parent=35 // pred_fallthru
          _
      $region36: #{tpu_custom_call.1} parent=5 // pred_fallthru
        _
      %p239 = scmp.le.s32.totalorder 1, %s19
      %p240 = scmp.lt.s32.totalorder %s19, 3
      %p241 = pnand %p239, %p240
      %p242 = pneg %p241
      // Predicated region
      $region41: #{tpu_custom_call.1} parent=5 // pred_check
        _
      $region42: #{tpu_custom_call.1} parent=5 // pred_check_branch
        %244 = sbr.rel (%p241) target = $region44
      $region43: #{tpu_custom_call.1} parent=5 // pred_region
        %s245 = ssub.s32 %s19, 1
        %s246 = sand.u32 %s32, 1
        %s247 = scalar_lea.sflag [#allocation3], %s246
        %s248 = sand.u32 %s32, 1
        %s249 = smul.addr %s248, 128
        %s250 = scalar_lea.vmem [#allocation2], %s249
        // Predicated region
        $region45: #{tpu_custom_call.1} parent=43 // pred_check
          %p251 = pneg %p45
        $region46: #{tpu_custom_call.1} parent=43 // pred_check_branch
          %253 = sbr.rel (%p251) target = $region48
        $region47: #{tpu_custom_call.1} parent=43 // pred_region
          %254 = dma.done %s247, 2048
        $region48: #{tpu_custom_call.1} parent=43 // pred_fallthru
          _
        // Predicated region
        $region49: #{tpu_custom_call.1} parent=43 // pred_check
          %p255 = pneg %p66
        $region50: #{tpu_custom_call.1} parent=43 // pred_check_branch
          %257 = sbr.rel (%p255) target = $region52
        $region51: #{tpu_custom_call.1} parent=43 // pred_region
          %258 = dma.done [#allocation6], 32
        $region52: #{tpu_custom_call.1} parent=43 // pred_fallthru
          _
        %s259 = sand.u32 %s32, 1
        %s260 = scalar_lea.sflag [#allocation3], %s259
        %s261 = sand.u32 %s32, 1
        %s262 = smul.addr %s261, 128
        %s263 = scalar_lea.vmem [#allocation2], %s262
        %p264 = pneg %p45
        %p265 = pneg %p42
        %p266 = pneg %p66
        %p267 = pneg %p63
        %p268 = pneg %p87
        %p269 = pneg %p84
        %p270 = pneg %p108
        %p271 = pneg %p105
        %p272 = pneg %p129
        %p273 = pneg %p126
        %p274 = pneg %p150
        %p275 = pneg %p147
        %p276 = pneg %p176
        %p277 = pneg %p173
        %s278 = sand.u32 %s163, 1
        %s279 = scalar_lea.sflag [#allocation4], %s278
        %s280 = sand.u32 %s163, 1
        %s281 = smul.addr %s280, 128
        %s282 = scalar_lea.vmem [#allocation7], %s281
        %v283 = vld [vmem:[%s250] sm:$0xff]
        %v284 = vld [vmem:[%s250 + $0x8] sm:$0xff]
        %v285 = vld [vmem:[%s250 + $0x10] sm:$0xff]
        %v286 = vld [vmem:[%s250 + $0x18] sm:$0xff]
        %v287 = vld [vmem:[%s250 + $0x20] sm:$0xff]
        %v288 = vld [vmem:[%s250 + $0x28] sm:$0xff]
        %v289 = vld [vmem:[%s250 + $0x30] sm:$0xff]
        %v290 = vld [vmem:[%s250 + $0x38] sm:$0xff]
        %v291 = vld [vmem:[%s250 + $0x40] sm:$0xff]
        %v292 = vld [vmem:[%s250 + $0x48] sm:$0xff]
        %v293 = vld [vmem:[%s250 + $0x50] sm:$0xff]
        %v294 = vld [vmem:[%s250 + $0x58] sm:$0xff]
        %v295 = vld [vmem:[%s250 + $0x60] sm:$0xff]
        %v296 = vld [vmem:[%s250 + $0x68] sm:$0xff]
        %v297 = vld [vmem:[%s250 + $0x70] sm:$0xff]
        %v298 = vld [vmem:[%s250 + $0x78] sm:$0xff]
        %vm299 = vcmask 130048
        %v300 = vsel %vm299, %v283, 0.0
        %301 = vadd.xlane.f32.xlu0 %v300
        %v302 = vpop.xlane.xlu0 %301
        %v303 = vsel %vm299, %v284, 0.0
        %304 = vadd.xlane.f32.xlu0 %v303
        %v305 = vpop.xlane.xlu0 %304
        %v306 = vsel %vm299, %v285, 0.0
        %307 = vadd.xlane.f32.xlu0 %v306
        %v308 = vpop.xlane.xlu0 %307
        %v309 = vsel %vm299, %v286, 0.0
        %310 = vadd.xlane.f32.xlu0 %v309
        %v311 = vpop.xlane.xlu0 %310
        %v312 = vsel %vm299, %v287, 0.0
        %313 = vadd.xlane.f32.xlu0 %v312
        %v314 = vpop.xlane.xlu0 %313
        %v315 = vsel %vm299, %v288, 0.0
        %316 = vadd.xlane.f32.xlu0 %v315
        %v317 = vpop.xlane.xlu0 %316
        %v318 = vsel %vm299, %v289, 0.0
        %319 = vadd.xlane.f32.xlu0 %v318
        %v320 = vpop.xlane.xlu0 %319
        %v321 = vsel %vm299, %v290, 0.0
        %322 = vadd.xlane.f32.xlu0 %v321
        %v323 = vpop.xlane.xlu0 %322
        %v324 = vsel %vm299, %v291, 0.0
        %325 = vadd.xlane.f32.xlu0 %v324
        %v326 = vpop.xlane.xlu0 %325
        %v327 = vsel %vm299, %v292, 0.0
        %328 = vadd.xlane.f32.xlu0 %v327
        %v329 = vpop.xlane.xlu0 %328
        %v330 = vsel %vm299, %v293, 0.0
        %331 = vadd.xlane.f32.xlu0 %v330
        %v332 = vpop.xlane.xlu0 %331
        %v333 = vsel %vm299, %v294, 0.0
        %334 = vadd.xlane.f32.xlu0 %v333
        %v335 = vpop.xlane.xlu0 %334
        %v336 = vsel %vm299, %v295, 0.0
        %337 = vadd.xlane.f32.xlu0 %v336
        %v338 = vpop.xlane.xlu0 %337
        %v339 = vsel %vm299, %v296, 0.0
        %340 = vadd.xlane.f32.xlu0 %v339
        %v341 = vpop.xlane.xlu0 %340
        %v342 = vsel %vm299, %v297, 0.0
        %343 = vadd.xlane.f32.xlu0 %v342
        %v344 = vpop.xlane.xlu0 %343
        %v345 = vsel %vm299, %v298, 0.0
        %346 = vadd.xlane.f32.xlu0 %v345
        %v347 = vpop.xlane.xlu0 %346
        %v348 = vrcp.pop 16.0
        %v349 = vmul.f32 %v302, %v348
        %v350 = vmul.f32 %v305, %v348
        %v351 = vmul.f32 %v308, %v348
        %v352 = vmul.f32 %v311, %v348
        %v353 = vmul.f32 %v314, %v348
        %v354 = vmul.f32 %v317, %v348
        %v355 = vmul.f32 %v320, %v348
        %v356 = vmul.f32 %v323, %v348
        %v357 = vmul.f32 %v326, %v348
        %v358 = vmul.f32 %v329, %v348
        %v359 = vmul.f32 %v332, %v348
        %v360 = vmul.f32 %v335, %v348
        %v361 = vmul.f32 %v338, %v348
        %v362 = vmul.f32 %v341, %v348
        %v363 = vmul.f32 %v344, %v348
        %v364 = vmul.f32 %v347, %v348
        %v365 = vsel %vm299, %v283, -inf
        %366 = vmax.xlane.f32.xlu0 %v365
        %v367 = vpop.xlane.xlu0 %366
        %v368 = vsel %vm299, %v284, -inf
        %369 = vmax.xlane.f32.xlu0 %v368
        %v370 = vpop.xlane.xlu0 %369
        %v371 = vsel %vm299, %v285, -inf
        %372 = vmax.xlane.f32.xlu0 %v371
        %v373 = vpop.xlane.xlu0 %372
        %v374 = vsel %vm299, %v286, -inf
        %375 = vmax.xlane.f32.xlu0 %v374
        %v376 = vpop.xlane.xlu0 %375
        %v377 = vsel %vm299, %v287, -inf
        %378 = vmax.xlane.f32.xlu0 %v377
        %v379 = vpop.xlane.xlu0 %378
        %v380 = vsel %vm299, %v288, -inf
        %381 = vmax.xlane.f32.xlu0 %v380
        %v382 = vpop.xlane.xlu0 %381
        %v383 = vsel %vm299, %v289, -inf
        %384 = vmax.xlane.f32.xlu0 %v383
        %v385 = vpop.xlane.xlu0 %384
        %v386 = vsel %vm299, %v290, -inf
        %387 = vmax.xlane.f32.xlu0 %v386
        %v388 = vpop.xlane.xlu0 %387
        %v389 = vsel %vm299, %v291, -inf
        %390 = vmax.xlane.f32.xlu0 %v389
        %v391 = vpop.xlane.xlu0 %390
        %v392 = vsel %vm299, %v292, -inf
        %393 = vmax.xlane.f32.xlu0 %v392
        %v394 = vpop.xlane.xlu0 %393
        %v395 = vsel %vm299, %v293, -inf
        %396 = vmax.xlane.f32.xlu0 %v395
        %v397 = vpop.xlane.xlu0 %396
        %v398 = vsel %vm299, %v294, -inf
        %399 = vmax.xlane.f32.xlu0 %v398
        %v400 = vpop.xlane.xlu0 %399
        %v401 = vsel %vm299, %v295, -inf
        %402 = vmax.xlane.f32.xlu0 %v401
        %v403 = vpop.xlane.xlu0 %402
        %v404 = vsel %vm299, %v296, -inf
        %405 = vmax.xlane.f32.xlu0 %v404
        %v406 = vpop.xlane.xlu0 %405
        %v407 = vsel %vm299, %v297, -inf
        %408 = vmax.xlane.f32.xlu0 %v407
        %v409 = vpop.xlane.xlu0 %408
        %v410 = vsel %vm299, %v298, -inf
        %411 = vmax.xlane.f32.xlu0 %v410
        %v412 = vpop.xlane.xlu0 %411
        %v413 = vadd.f32 %v349, %v367
        %v414 = vadd.f32 %v350, %v370
        %v415 = vadd.f32 %v351, %v373
        %v416 = vadd.f32 %v352, %v376
        %v417 = vadd.f32 %v353, %v379
        %v418 = vadd.f32 %v354, %v382
        %v419 = vadd.f32 %v355, %v385
        %v420 = vadd.f32 %v356, %v388
        %v421 = vadd.f32 %v357, %v391
        %v422 = vadd.f32 %v358, %v394
        %v423 = vadd.f32 %v359, %v397
        %v424 = vadd.f32 %v360, %v400
        %v425 = vadd.f32 %v361, %v403
        %v426 = vadd.f32 %v362, %v406
        %v427 = vadd.f32 %v363, %v409
        %v428 = vadd.f32 %v364, %v412
        %v429 = vadd.f32 %v300, %v303
        %v430 = vrot.slane %v429, 4
        %v431 = vadd.f32 %v429, %v430
        %v432 = vrot.slane %v431, 2
        %v433 = vadd.f32 %v431, %v432
        %v434 = vrot.slane %v433, 1
        %v435 = vadd.f32 %v433, %v434
        %v436 = vadd.f32 %v306, %v309
        %v437 = vrot.slane %v436, 4
        %v438 = vadd.f32 %v436, %v437
        %v439 = vrot.slane %v438, 2
        %v440 = vadd.f32 %v438, %v439
        %v441 = vrot.slane %v440, 1
        %v442 = vadd.f32 %v440, %v441
        %v443 = vadd.f32 %v312, %v315
        %v444 = vrot.slane %v443, 4
        %v445 = vadd.f32 %v443, %v444
        %v446 = vrot.slane %v445, 2
        %v447 = vadd.f32 %v445, %v446
        %v448 = vrot.slane %v447, 1
        %v449 = vadd.f32 %v447, %v448
        %v450 = vadd.f32 %v318, %v321
        %v451 = vrot.slane %v450, 4
        %v452 = vadd.f32 %v450, %v451
        %v453 = vrot.slane %v452, 2
        %v454 = vadd.f32 %v452, %v453
        %v455 = vrot.slane %v454, 1
        %v456 = vadd.f32 %v454, %v455
        %v457 = vadd.f32 %v324, %v327
        %v458 = vrot.slane %v457, 4
        %v459 = vadd.f32 %v457, %v458
        %v460 = vrot.slane %v459, 2
        %v461 = vadd.f32 %v459, %v460
        %v462 = vrot.slane %v461, 1
        %v463 = vadd.f32 %v461, %v462
        %v464 = vadd.f32 %v330, %v333
        %v465 = vrot.slane %v464, 4
        %v466 = vadd.f32 %v464, %v465
        %v467 = vrot.slane %v466, 2
        %v468 = vadd.f32 %v466, %v467
        %v469 = vrot.slane %v468, 1
        %v470 = vadd.f32 %v468, %v469
        %v471 = vadd.f32 %v336, %v339
        %v472 = vrot.slane %v471, 4
        %v473 = vadd.f32 %v471, %v472
        %v474 = vrot.slane %v473, 2
        %v475 = vadd.f32 %v473, %v474
        %v476 = vrot.slane %v475, 1
        %v477 = vadd.f32 %v475, %v476
        %v478 = vadd.f32 %v342, %v345
        %v479 = vrot.slane %v478, 4
        %v480 = vadd.f32 %v478, %v479
        %v481 = vrot.slane %v480, 2
        %v482 = vadd.f32 %v480, %v481
        %v483 = vrot.slane %v482, 1
        %v484 = vadd.f32 %v482, %v483
        %v485 = vmul.f32 %v435, %v348
        %v486 = vmul.f32 %v442, %v348
        %v487 = vmul.f32 %v449, %v348
        %v488 = vmul.f32 %v456, %v348
        %v489 = vmul.f32 %v463, %v348
        %v490 = vmul.f32 %v470, %v348
        %v491 = vmul.f32 %v477, %v348
        %v492 = vmul.f32 %v484, %v348
        %v493 = vmax.f32 %v365, %v368
        %v494 = vrot.slane %v493, 4
        %v495 = vmax.f32 %v493, %v494
        %v496 = vrot.slane %v495, 2
        %v497 = vmax.f32 %v495, %v496
        %v498 = vrot.slane %v497, 1
        %v499 = vmax.f32 %v497, %v498
        %v500 = vmax.f32 %v371, %v374
        %v501 = vrot.slane %v500, 4
        %v502 = vmax.f32 %v500, %v501
        %v503 = vrot.slane %v502, 2
        %v504 = vmax.f32 %v502, %v503
        %v505 = vrot.slane %v504, 1
        %v506 = vmax.f32 %v504, %v505
        %v507 = vmax.f32 %v377, %v380
        %v508 = vrot.slane %v507, 4
        %v509 = vmax.f32 %v507, %v508
        %v510 = vrot.slane %v509, 2
        %v511 = vmax.f32 %v509, %v510
        %v512 = vrot.slane %v511, 1
        %v513 = vmax.f32 %v511, %v512
        %v514 = vmax.f32 %v383, %v386
        %v515 = vrot.slane %v514, 4
        %v516 = vmax.f32 %v514, %v515
        %v517 = vrot.slane %v516, 2
        %v518 = vmax.f32 %v516, %v517
        %v519 = vrot.slane %v518, 1
        %v520 = vmax.f32 %v518, %v519
        %v521 = vmax.f32 %v389, %v392
        %v522 = vrot.slane %v521, 4
        %v523 = vmax.f32 %v521, %v522
        %v524 = vrot.slane %v523, 2
        %v525 = vmax.f32 %v523, %v524
        %v526 = vrot.slane %v525, 1
        %v527 = vmax.f32 %v525, %v526
        %v528 = vmax.f32 %v395, %v398
        %v529 = vrot.slane %v528, 4
        %v530 = vmax.f32 %v528, %v529
        %v531 = vrot.slane %v530, 2
        %v532 = vmax.f32 %v530, %v531
        %v533 = vrot.slane %v532, 1
        %v534 = vmax.f32 %v532, %v533
        %v535 = vmax.f32 %v401, %v404
        %v536 = vrot.slane %v535, 4
        %v537 = vmax.f32 %v535, %v536
        %v538 = vrot.slane %v537, 2
        %v539 = vmax.f32 %v537, %v538
        %v540 = vrot.slane %v539, 1
        %v541 = vmax.f32 %v539, %v540
        %v542 = vmax.f32 %v407, %v410
        %v543 = vrot.slane %v542, 4
        %v544 = vmax.f32 %v542, %v543
        %v545 = vrot.slane %v544, 2
        %v546 = vmax.f32 %v544, %v545
        %v547 = vrot.slane %v546, 1
        %v548 = vmax.f32 %v546, %v547
        %v549 = vadd.f32 %v485, %v499
        %v550 = vadd.f32 %v486, %v506
        %v551 = vadd.f32 %v487, %v513
        %v552 = vadd.f32 %v488, %v520
        %v553 = vadd.f32 %v489, %v527
        %v554 = vadd.f32 %v490, %v534
        %v555 = vadd.f32 %v491, %v541
        %v556 = vadd.f32 %v492, %v548
        %v557 = vld [vmem:[#allocation5] sm:$0x3]
        %v558 = vld [vmem:[%s2] sm:$0x3]
        %560 = vset.pattern.permute.xlu0 0
        %561 = vperm.xlu0 %560, %v558
        %v562 = vpop.permute.xlu0 %561
        %v580 = vlaneseq
        %v581 = vand.u32 %v580, 127
        %v582 = vlaneseq
        %v583 = vshrl.u32 %v582, 7
        %v584 = vsub.s32 %v581, %v583
        %v585 = vrot.slane %v413, %v584
        %v586 = vadd.s32 %v581, 4294967288
        %v587 = vlaneseq
        %v588 = vshrl.u32 %v587, 7
        %v589 = vsub.s32 %v586, %v588
        %v590 = vrot.slane %v414, %v589
        %vm591 = vcmask 130112
        %v592 = vsel %vm591, %v590, %v585
        %v593 = vlaneseq
        %v594 = vshrl.u32 %v593, 7
        %v595 = vsub.s32 %v581, %v594
        %v596 = vrot.slane %v415, %v595
        %v597 = vlaneseq
        %v598 = vshrl.u32 %v597, 7
        %v599 = vsub.s32 %v586, %v598
        %v600 = vrot.slane %v416, %v599
        %v601 = vsel %vm591, %v600, %v596
        %v602 = vlaneseq
        %v603 = vshrl.u32 %v602, 7
        %v604 = vsub.s32 %v581, %v603
        %v605 = vrot.slane %v417, %v604
        %v606 = vlaneseq
        %v607 = vshrl.u32 %v606, 7
        %v608 = vsub.s32 %v586, %v607
        %v609 = vrot.slane %v418, %v608
        %v610 = vsel %vm591, %v609, %v605
        %v611 = vlaneseq
        %v612 = vshrl.u32 %v611, 7
        %v613 = vsub.s32 %v581, %v612
        %v614 = vrot.slane %v419, %v613
        %v615 = vlaneseq
        %v616 = vshrl.u32 %v615, 7
        %v617 = vsub.s32 %v586, %v616
        %v618 = vrot.slane %v420, %v617
        %v619 = vsel %vm591, %v618, %v614
        %v620 = vlaneseq
        %v621 = vshrl.u32 %v620, 7
        %v622 = vsub.s32 %v581, %v621
        %v623 = vrot.slane %v421, %v622
        %v624 = vlaneseq
        %v625 = vshrl.u32 %v624, 7
        %v626 = vsub.s32 %v586, %v625
        %v627 = vrot.slane %v422, %v626
        %v628 = vsel %vm591, %v627, %v623
        %v629 = vlaneseq
        %v630 = vshrl.u32 %v629, 7
        %v631 = vsub.s32 %v581, %v630
        %v632 = vrot.slane %v423, %v631
        %v633 = vlaneseq
        %v634 = vshrl.u32 %v633, 7
        %v635 = vsub.s32 %v586, %v634
        %v636 = vrot.slane %v424, %v635
        %v637 = vsel %vm591, %v636, %v632
        %v638 = vlaneseq
        %v639 = vshrl.u32 %v638, 7
        %v640 = vsub.s32 %v581, %v639
        %v641 = vrot.slane %v425, %v640
        %v642 = vlaneseq
        %v643 = vshrl.u32 %v642, 7
        %v644 = vsub.s32 %v586, %v643
        %v645 = vrot.slane %v426, %v644
        %v646 = vsel %vm591, %v645, %v641
        %v647 = vlaneseq
        %v648 = vshrl.u32 %v647, 7
        %v649 = vsub.s32 %v581, %v648
        %v650 = vrot.slane %v427, %v649
        %v651 = vlaneseq
        %v652 = vshrl.u32 %v651, 7
        %v653 = vsub.s32 %v586, %v652
        %v654 = vrot.slane %v428, %v653
        %v655 = vsel %vm591, %v654, %v650
        %vm656 = vcmask 1041409
        %v657 = vsel %vm656, %v601, %v592
        %vm658 = vcmask 1042434
        %v659 = vsel %vm658, %v610, %v657
        %vm660 = vcmask 1043459
        %v661 = vsel %vm660, %v619, %v659
        %vm662 = vcmask 1044484
        %v663 = vsel %vm662, %v628, %v661
        %vm664 = vcmask 1045509
        %v665 = vsel %vm664, %v637, %v663
        %vm666 = vcmask 1046534
        %v667 = vsel %vm666, %v646, %v665
        %vm668 = vcmask 1047559
        %v669 = vsel %vm668, %v655, %v667
        %vm671 = vcmask 64512
        %v673 = vsel %vm671, %v557, 0
        %675 = vmatprep.subr.mxu0 0.0
        %676 = vmatpush1.msra.mxu0 0.0
        %677 = vmatprep.subr.mxu0 0.0
        %678 = vmatpush1.msra.mxu0 0.0
        %679 = vmatprep.subr.mxu0 0.0
        %680 = vmatpush1.msra.mxu0 0.0
        %681 = vmatprep.subr.mxu0 0.0
        %682 = vmatpush1.msra.mxu0 0.0
        %683 = vmatprep.subr.mxu0 0.0
        %684 = vmatpush1.msra.mxu0 0.0
        %685 = vmatprep.subr.mxu0 0.0
        %686 = vmatpush1.msra.mxu0 0.0
        %687 = vmatprep.subr.mxu0 0.0
        %688 = vmatpush1.msra.mxu0 0.0
        %689 = vmatprep.subr.mxu0 0.0
        %690 = vmatpush1.msra.mxu0 0.0
        %691 = vmatprep.subr.mxu0 0.0
        %692 = vmatpush1.msra.mxu0 0.0
        %693 = vmatprep.subr.mxu0 0.0
        %694 = vmatpush1.msra.mxu0 0.0
        %695 = vmatprep.subr.mxu0 0.0
        %696 = vmatpush1.msra.mxu0 0.0
        %697 = vmatprep.subr.mxu0 0.0
        %698 = vmatpush1.msra.mxu0 0.0
        %699 = vmatprep.subr.mxu0 0.0
        %700 = vmatpush1.msra.mxu0 0.0
        %701 = vmatprep.subr.mxu0 0.0
        %702 = vmatpush1.msra.mxu0 0.0
        %703 = vmatprep.subr.mxu0 0.0
        %704 = vmatpush1.msra.mxu0 0.0
        %705 = vmatprep.subr.mxu0 0.0
        %706 = vmatpush1.msra.mxu0 %v669
        %707 = vmatprep.subr.mxu0 0.0
        %708 = vmatpush2.msra.mxu0 0.0
        %709 = vmatprep.subr.mxu0 0.0
        %710 = vmatpush2.msra.mxu0 0.0
        %711 = vmatprep.subr.mxu0 0.0
        %712 = vmatpush2.msra.mxu0 0.0
        %713 = vmatprep.subr.mxu0 0.0
        %714 = vmatpush2.msra.mxu0 0.0
        %715 = vmatprep.subr.mxu0 0.0
        %716 = vmatpush2.msra.mxu0 0.0
        %717 = vmatprep.subr.mxu0 0.0
        %718 = vmatpush2.msra.mxu0 0.0
        %719 = vmatprep.subr.mxu0 0.0
        %720 = vmatpush2.msra.mxu0 0.0
        %721 = vmatprep.subr.mxu0 0.0
        %722 = vmatpush2.msra.mxu0 0.0
        %723 = vmatprep.subr.mxu0 0.0
        %724 = vmatpush2.msra.mxu0 0.0
        %725 = vmatprep.subr.mxu0 0.0
        %726 = vmatpush2.msra.mxu0 0.0
        %727 = vmatprep.subr.mxu0 0.0
        %728 = vmatpush2.msra.mxu0 0.0
        %729 = vmatprep.subr.mxu0 0.0
        %730 = vmatpush2.msra.mxu0 0.0
        %731 = vmatprep.subr.mxu0 0.0
        %732 = vmatpush2.msra.mxu0 0.0
        %733 = vmatprep.subr.mxu0 0.0
        %734 = vmatpush2.msra.mxu0 0.0
        %735 = vmatprep.subr.mxu0 0.0
        %736 = vmatpush2.msra.mxu0 0.0
        %737 = vmatprep.subr.mxu0 0.0
        %738 = vmatpush2.msra.mxu0 0.0
        %739 = vmatprep.mubr.f32.mxu0 0.0
        %740 = vmatmul.mubr.f32.gmra.mxu0 %v673
        %v741 = vpop.f32.mrf.mxu0
        %v742 = vadd.f32 %v562, %v741
        %v743 = vpop.f32.mrf.mxu0
        %744 = vdwg.mxu0
        %v745 = vmax.f32 %v742, 0.0
        %v746 = vmin.f32 %v745, 6.0
        %v755 = vsel %vm656, %v550, %v549
        %v756 = vsel %vm658, %v551, %v755
        %v757 = vsel %vm660, %v552, %v756
        %v758 = vsel %vm662, %v553, %v757
        %v759 = vsel %vm664, %v554, %v758
        %v760 = vsel %vm666, %v555, %v759
        %v761 = vsel %vm668, %v556, %v760
        %763 = vmatprep.subr.mxu0 0.0
        %764 = vmatpush1.msra.mxu0 0.0
        %765 = vmatprep.subr.mxu0 0.0
        %766 = vmatpush1.msra.mxu0 0.0
        %767 = vmatprep.subr.mxu0 0.0
        %768 = vmatpush1.msra.mxu0 0.0
        %769 = vmatprep.subr.mxu0 0.0
        %770 = vmatpush1.msra.mxu0 0.0
        %771 = vmatprep.subr.mxu0 0.0
        %772 = vmatpush1.msra.mxu0 0.0
        %773 = vmatprep.subr.mxu0 0.0
        %774 = vmatpush1.msra.mxu0 0.0
        %775 = vmatprep.subr.mxu0 0.0
        %776 = vmatpush1.msra.mxu0 0.0
        %777 = vmatprep.subr.mxu0 0.0
        %778 = vmatpush1.msra.mxu0 0.0
        %779 = vmatprep.subr.mxu0 0.0
        %780 = vmatpush1.msra.mxu0 0.0
        %781 = vmatprep.subr.mxu0 0.0
        %782 = vmatpush1.msra.mxu0 0.0
        %783 = vmatprep.subr.mxu0 0.0
        %784 = vmatpush1.msra.mxu0 0.0
        %785 = vmatprep.subr.mxu0 0.0
        %786 = vmatpush1.msra.mxu0 0.0
        %787 = vmatprep.subr.mxu0 0.0
        %788 = vmatpush1.msra.mxu0 0.0
        %789 = vmatprep.subr.mxu0 0.0
        %790 = vmatpush1.msra.mxu0 0.0
        %791 = vmatprep.subr.mxu0 0.0
        %792 = vmatpush1.msra.mxu0 0.0
        %793 = vmatprep.subr.mxu0 0.0
        %794 = vmatpush1.msra.mxu0 %v761
        %795 = vmatprep.subr.mxu0 0.0
        %796 = vmatpush2.msra.mxu0 0.0
        %797 = vmatprep.subr.mxu0 0.0
        %798 = vmatpush2.msra.mxu0 0.0
        %799 = vmatprep.subr.mxu0 0.0
        %800 = vmatpush2.msra.mxu0 0.0
        %801 = vmatprep.subr.mxu0 0.0
        %802 = vmatpush2.msra.mxu0 0.0
        %803 = vmatprep.subr.mxu0 0.0
        %804 = vmatpush2.msra.mxu0 0.0
        %805 = vmatprep.subr.mxu0 0.0
        %806 = vmatpush2.msra.mxu0 0.0
        %807 = vmatprep.subr.mxu0 0.0
        %808 = vmatpush2.msra.mxu0 0.0
        %809 = vmatprep.subr.mxu0 0.0
        %810 = vmatpush2.msra.mxu0 0.0
        %811 = vmatprep.subr.mxu0 0.0
        %812 = vmatpush2.msra.mxu0 0.0
        %813 = vmatprep.subr.mxu0 0.0
        %814 = vmatpush2.msra.mxu0 0.0
        %815 = vmatprep.subr.mxu0 0.0
        %816 = vmatpush2.msra.mxu0 0.0
        %817 = vmatprep.subr.mxu0 0.0
        %818 = vmatpush2.msra.mxu0 0.0
        %819 = vmatprep.subr.mxu0 0.0
        %820 = vmatpush2.msra.mxu0 0.0
        %821 = vmatprep.subr.mxu0 0.0
        %822 = vmatpush2.msra.mxu0 0.0
        %823 = vmatprep.subr.mxu0 0.0
        %824 = vmatpush2.msra.mxu0 0.0
        %825 = vmatprep.subr.mxu0 0.0
        %826 = vmatpush2.msra.mxu0 0.0
        %827 = vmatprep.mubr.f32.mxu0 0.0
        %828 = vmatmul.mubr.f32.gmra.mxu0 %v673
        %v829 = vpop.f32.mrf.mxu0
        %v830 = vadd.f32 %v562, %v829
        %v831 = vpop.f32.mrf.mxu0
        %832 = vdwg.mxu0
        %v833 = vmax.f32 %v830, 0.0
        %v834 = vmin.f32 %v833, 6.0
        %v835 = vld [vmem:[%s5] sm:$0xff]
        %v836 = vld [vmem:[%s3] sm:$0xff]
        %838 = vrot.lane.b32.xlu0 %v746, 1
        %v839 = vpop.permute.xlu0 %838
        %vm841 = vcmask 7168
        %v842 = vsel %vm841, 0.0, %v839
        %843 = vrot.lane.b32.xlu0 %v746, 127
        %v844 = vpop.permute.xlu0 %843
        %vm846 = vcmask 121856
        %v847 = vsel %vm846, %v844, 0.0
        %v848 = vrot.slane %v746, 6
        %v851 = vrot.slane %v847, 4
        %vm853 = vcmask 1041408
        %v854 = vsel %vm853, %v842, %v848
        %vm855 = vcmask 1043456
        %v856 = vsel %vm855, %v854, %v851
        %858 = vset.pattern.permute.xlu0 0
        %859 = vperm.xlu0 %858, %v835
        %v860 = vpop.permute.xlu0 %859
        %vm862 = vcmask 48128
        %v864 = vsel %vm862, %v836, 0
        %vm866 = vcmask 1045504
        %v868 = vsel %vm866, %v856, 0
        %870 = vmatprep.subr.mxu0 0.0
        %871 = vmatpush1.msra.mxu0 0.0
        %872 = vmatprep.subr.mxu0 0.0
        %873 = vmatpush1.msra.mxu0 0.0
        %874 = vmatprep.subr.mxu0 0.0
        %875 = vmatpush1.msra.mxu0 0.0
        %876 = vmatprep.subr.mxu0 0.0
        %877 = vmatpush1.msra.mxu0 0.0
        %878 = vmatprep.subr.mxu0 0.0
        %879 = vmatpush1.msra.mxu0 0.0
        %880 = vmatprep.subr.mxu0 0.0
        %881 = vmatpush1.msra.mxu0 0.0
        %882 = vmatprep.subr.mxu0 0.0
        %883 = vmatpush1.msra.mxu0 0.0
        %884 = vmatprep.subr.mxu0 0.0
        %885 = vmatpush1.msra.mxu0 0.0
        %886 = vmatprep.subr.mxu0 0.0
        %887 = vmatpush1.msra.mxu0 0.0
        %888 = vmatprep.subr.mxu0 0.0
        %889 = vmatpush1.msra.mxu0 0.0
        %890 = vmatprep.subr.mxu0 0.0
        %891 = vmatpush1.msra.mxu0 0.0
        %892 = vmatprep.subr.mxu0 0.0
        %893 = vmatpush1.msra.mxu0 0.0
        %894 = vmatprep.subr.mxu0 0.0
        %895 = vmatpush1.msra.mxu0 0.0
        %896 = vmatprep.subr.mxu0 0.0
        %897 = vmatpush1.msra.mxu0 0.0
        %898 = vmatprep.subr.mxu0 0.0
        %899 = vmatpush1.msra.mxu0 0.0
        %900 = vmatprep.subr.mxu0 0.0
        %901 = vmatpush1.msra.mxu0 %v868
        %902 = vmatprep.subr.mxu0 0.0
        %903 = vmatpush2.msra.mxu0 0.0
        %904 = vmatprep.subr.mxu0 0.0
        %905 = vmatpush2.msra.mxu0 0.0
        %906 = vmatprep.subr.mxu0 0.0
        %907 = vmatpush2.msra.mxu0 0.0
        %908 = vmatprep.subr.mxu0 0.0
        %909 = vmatpush2.msra.mxu0 0.0
        %910 = vmatprep.subr.mxu0 0.0
        %911 = vmatpush2.msra.mxu0 0.0
        %912 = vmatprep.subr.mxu0 0.0
        %913 = vmatpush2.msra.mxu0 0.0
        %914 = vmatprep.subr.mxu0 0.0
        %915 = vmatpush2.msra.mxu0 0.0
        %916 = vmatprep.subr.mxu0 0.0
        %917 = vmatpush2.msra.mxu0 0.0
        %918 = vmatprep.subr.mxu0 0.0
        %919 = vmatpush2.msra.mxu0 0.0
        %920 = vmatprep.subr.mxu0 0.0
        %921 = vmatpush2.msra.mxu0 0.0
        %922 = vmatprep.subr.mxu0 0.0
        %923 = vmatpush2.msra.mxu0 0.0
        %924 = vmatprep.subr.mxu0 0.0
        %925 = vmatpush2.msra.mxu0 0.0
        %926 = vmatprep.subr.mxu0 0.0
        %927 = vmatpush2.msra.mxu0 0.0
        %928 = vmatprep.subr.mxu0 0.0
        %929 = vmatpush2.msra.mxu0 0.0
        %930 = vmatprep.subr.mxu0 0.0
        %931 = vmatpush2.msra.mxu0 0.0
        %932 = vmatprep.subr.mxu0 0.0
        %933 = vmatpush2.msra.mxu0 0.0
        %934 = vmatprep.mubr.f32.mxu0 0.0
        %935 = vmatmul.mubr.f32.gmra.mxu0 %v864
        %v936 = vpop.f32.mrf.mxu0
        %v937 = vadd.f32 %v860, %v936
        %v938 = vpop.f32.mrf.mxu0
        %939 = vdwg.mxu0
        %v940 = vld [vmem:[%s4] sm:$0xff]
        %942 = vrot.lane.b32.xlu0 %v834, 1
        %v943 = vpop.permute.xlu0 %942
        %v945 = vsel %vm841, 0.0, %v943
        %946 = vrot.lane.b32.xlu0 %v834, 127
        %v947 = vpop.permute.xlu0 %946
        %v949 = vsel %vm846, %v947, 0.0
        %v950 = vrot.slane %v834, 6
        %v953 = vrot.slane %v949, 4
        %v955 = vsel %vm853, %v945, %v950
        %v956 = vsel %vm855, %v955, %v953
        %v958 = vsel %vm862, %v940, 0
        %v961 = vsel %vm866, %v956, 0
        %963 = vmatprep.subr.mxu0 0.0
        %964 = vmatpush1.msra.mxu0 0.0
        %965 = vmatprep.subr.mxu0 0.0
        %966 = vmatpush1.msra.mxu0 0.0
        %967 = vmatprep.subr.mxu0 0.0
        %968 = vmatpush1.msra.mxu0 0.0
        %969 = vmatprep.subr.mxu0 0.0
        %970 = vmatpush1.msra.mxu0 0.0
        %971 = vmatprep.subr.mxu0 0.0
        %972 = vmatpush1.msra.mxu0 0.0
        %973 = vmatprep.subr.mxu0 0.0
        %974 = vmatpush1.msra.mxu0 0.0
        %975 = vmatprep.subr.mxu0 0.0
        %976 = vmatpush1.msra.mxu0 0.0
        %977 = vmatprep.subr.mxu0 0.0
        %978 = vmatpush1.msra.mxu0 0.0
        %979 = vmatprep.subr.mxu0 0.0
        %980 = vmatpush1.msra.mxu0 0.0
        %981 = vmatprep.subr.mxu0 0.0
        %982 = vmatpush1.msra.mxu0 0.0
        %983 = vmatprep.subr.mxu0 0.0
        %984 = vmatpush1.msra.mxu0 0.0
        %985 = vmatprep.subr.mxu0 0.0
        %986 = vmatpush1.msra.mxu0 0.0
        %987 = vmatprep.subr.mxu0 0.0
        %988 = vmatpush1.msra.mxu0 0.0
        %989 = vmatprep.subr.mxu0 0.0
        %990 = vmatpush1.msra.mxu0 0.0
        %991 = vmatprep.subr.mxu0 0.0
        %992 = vmatpush1.msra.mxu0 0.0
        %993 = vmatprep.subr.mxu0 0.0
        %994 = vmatpush1.msra.mxu0 %v961
        %995 = vmatprep.subr.mxu0 0.0
        %996 = vmatpush2.msra.mxu0 0.0
        %997 = vmatprep.subr.mxu0 0.0
        %998 = vmatpush2.msra.mxu0 0.0
        %999 = vmatprep.subr.mxu0 0.0
        %1000 = vmatpush2.msra.mxu0 0.0
        %1001 = vmatprep.subr.mxu0 0.0
        %1002 = vmatpush2.msra.mxu0 0.0
        %1003 = vmatprep.subr.mxu0 0.0
        %1004 = vmatpush2.msra.mxu0 0.0
        %1005 = vmatprep.subr.mxu0 0.0
        %1006 = vmatpush2.msra.mxu0 0.0
        %1007 = vmatprep.subr.mxu0 0.0
        %1008 = vmatpush2.msra.mxu0 0.0
        %1009 = vmatprep.subr.mxu0 0.0
        %1010 = vmatpush2.msra.mxu0 0.0
        %1011 = vmatprep.subr.mxu0 0.0
        %1012 = vmatpush2.msra.mxu0 0.0
        %1013 = vmatprep.subr.mxu0 0.0
        %1014 = vmatpush2.msra.mxu0 0.0
        %1015 = vmatprep.subr.mxu0 0.0
        %1016 = vmatpush2.msra.mxu0 0.0
        %1017 = vmatprep.subr.mxu0 0.0
        %1018 = vmatpush2.msra.mxu0 0.0
        %1019 = vmatprep.subr.mxu0 0.0
        %1020 = vmatpush2.msra.mxu0 0.0
        %1021 = vmatprep.subr.mxu0 0.0
        %1022 = vmatpush2.msra.mxu0 0.0
        %1023 = vmatprep.subr.mxu0 0.0
        %1024 = vmatpush2.msra.mxu0 0.0
        %1025 = vmatprep.subr.mxu0 0.0
        %1026 = vmatpush2.msra.mxu0 0.0
        %1027 = vmatprep.mubr.f32.mxu0 0.0
        %1028 = vmatmul.mubr.f32.gmra.mxu0 %v958
        %v1029 = vpop.f32.mrf.mxu0
        %v1030 = vadd.f32 %v860, %v1029
        %v1031 = vpop.f32.mrf.mxu0
        %1032 = vdwg.mxu0
        %v1033 = vlaneseq
        %v1034 = vshrl.u32 %v1033, 7
        %v1035 = vsub.s32 0, %v1034
        %v1036 = vrot.slane %v937, %v1035
        %1038 = vbcast.lane.b32.xlu0 %v1036, 256
        %v1039 = vpop.permute.xlu0 %1038
        %s1041 = sor.u32 256, 8
        %1042 = vbcast.lane.b32.xlu0 %v1036, %s1041
        %v1043 = vpop.permute.xlu0 %1042
        %v1044 = vlaneseq
        %v1045 = vshrl.u32 %v1044, 7
        %v1046 = vsub.s32 1, %v1045
        %v1047 = vrot.slane %v937, %v1046
        %1049 = vbcast.lane.b32.xlu0 %v1047, 256
        %v1050 = vpop.permute.xlu0 %1049
        %s1052 = sor.u32 256, 8
        %1053 = vbcast.lane.b32.xlu0 %v1047, %s1052
        %v1054 = vpop.permute.xlu0 %1053
        %v1055 = vlaneseq
        %v1056 = vshrl.u32 %v1055, 7
        %v1057 = vsub.s32 2, %v1056
        %v1058 = vrot.slane %v937, %v1057
        %1060 = vbcast.lane.b32.xlu0 %v1058, 256
        %v1061 = vpop.permute.xlu0 %1060
        %s1063 = sor.u32 256, 8
        %1064 = vbcast.lane.b32.xlu0 %v1058, %s1063
        %v1065 = vpop.permute.xlu0 %1064
        %v1066 = vlaneseq
        %v1067 = vshrl.u32 %v1066, 7
        %v1068 = vsub.s32 3, %v1067
        %v1069 = vrot.slane %v937, %v1068
        %1071 = vbcast.lane.b32.xlu0 %v1069, 256
        %v1072 = vpop.permute.xlu0 %1071
        %s1074 = sor.u32 256, 8
        %1075 = vbcast.lane.b32.xlu0 %v1069, %s1074
        %v1076 = vpop.permute.xlu0 %1075
        %v1077 = vlaneseq
        %v1078 = vshrl.u32 %v1077, 7
        %v1079 = vsub.s32 4, %v1078
        %v1080 = vrot.slane %v937, %v1079
        %1082 = vbcast.lane.b32.xlu0 %v1080, 256
        %v1083 = vpop.permute.xlu0 %1082
        %s1085 = sor.u32 256, 8
        %1086 = vbcast.lane.b32.xlu0 %v1080, %s1085
        %v1087 = vpop.permute.xlu0 %1086
        %v1088 = vlaneseq
        %v1089 = vshrl.u32 %v1088, 7
        %v1090 = vsub.s32 5, %v1089
        %v1091 = vrot.slane %v937, %v1090
        %1093 = vbcast.lane.b32.xlu0 %v1091, 256
        %v1094 = vpop.permute.xlu0 %1093
        %s1096 = sor.u32 256, 8
        %1097 = vbcast.lane.b32.xlu0 %v1091, %s1096
        %v1098 = vpop.permute.xlu0 %1097
        %v1099 = vlaneseq
        %v1100 = vshrl.u32 %v1099, 7
        %v1101 = vsub.s32 6, %v1100
        %v1102 = vrot.slane %v937, %v1101
        %1104 = vbcast.lane.b32.xlu0 %v1102, 256
        %v1105 = vpop.permute.xlu0 %1104
        %s1107 = sor.u32 256, 8
        %1108 = vbcast.lane.b32.xlu0 %v1102, %s1107
        %v1109 = vpop.permute.xlu0 %1108
        %v1110 = vlaneseq
        %v1111 = vshrl.u32 %v1110, 7
        %v1112 = vsub.s32 7, %v1111
        %v1113 = vrot.slane %v937, %v1112
        %1115 = vbcast.lane.b32.xlu0 %v1113, 256
        %v1116 = vpop.permute.xlu0 %1115
        %s1118 = sor.u32 256, 8
        %1119 = vbcast.lane.b32.xlu0 %v1113, %s1118
        %v1120 = vpop.permute.xlu0 %1119
        %v1122 = vcombine.high %v1030, %v1030
        %v1124 = vunpack.c.l.s4 1966171168
        %v1125 = vunpack.c.0.s8 %v1124
        %v1126 = vlaneseq
        %v1127 = vshrl.u32 %v1126, 7
        %v1128 = vsub.s32 %v1125, %v1127
        %v1129 = vrot.slane %v1030, %v1128
        %v1131 = vunpack.c.l.s4 1966171168
        %v1132 = vunpack.c.0.s8 %v1131
        %v1133 = vlaneseq
        %v1134 = vshrl.u32 %v1133, 7
        %v1135 = vsub.s32 %v1132, %v1134
        %v1136 = vrot.slane %v1122, %v1135
        %v1137 = vcombine.high %v1129, %v1129
        %v1138 = vcombine.high %v1136, %v1136
        %v1140 = vunpack.c.l.s4 1966171168
        %v1141 = vunpack.c.0.s8 %v1140
        %v1142 = vlaneseq
        %v1143 = vshrl.u32 %v1142, 7
        %v1144 = vsub.s32 %v1141, %v1143
        %v1145 = vrot.slane %v1129, %v1144
        %v1147 = vunpack.c.l.s4 1966171168
        %v1148 = vunpack.c.0.s8 %v1147
        %v1149 = vlaneseq
        %v1150 = vshrl.u32 %v1149, 7
        %v1151 = vsub.s32 %v1148, %v1150
        %v1152 = vrot.slane %v1136, %v1151
        %v1154 = vunpack.c.l.s4 1966171168
        %v1155 = vunpack.c.0.s8 %v1154
        %v1156 = vlaneseq
        %v1157 = vshrl.u32 %v1156, 7
        %v1158 = vsub.s32 %v1155, %v1157
        %v1159 = vrot.slane %v1137, %v1158
        %v1161 = vunpack.c.l.s4 1966171168
        %v1162 = vunpack.c.0.s8 %v1161
        %v1163 = vlaneseq
        %v1164 = vshrl.u32 %v1163, 7
        %v1165 = vsub.s32 %v1162, %v1164
        %v1166 = vrot.slane %v1138, %v1165
        %v1167 = vcombine.high %v1145, %v1145
        %v1168 = vcombine.high %v1152, %v1152
        %v1169 = vcombine.high %v1159, %v1159
        %v1170 = vcombine.high %v1166, %v1166
        %v1171 = vlaneseq
        %v1172 = vshrl.u32 %v1171, 7
        %v1173 = vsub.s32 0, %v1172
        %v1174 = vrot.slane %v1145, %v1173
        %v1175 = vlaneseq
        %v1176 = vshrl.u32 %v1175, 7
        %v1177 = vsub.s32 0, %v1176
        %v1178 = vrot.slane %v1159, %v1177
        %v1179 = vlaneseq
        %v1180 = vshrl.u32 %v1179, 7
        %v1181 = vsub.s32 0, %v1180
        %v1182 = vrot.slane %v1167, %v1181
        %v1183 = vlaneseq
        %v1184 = vshrl.u32 %v1183, 7
        %v1185 = vsub.s32 0, %v1184
        %v1186 = vrot.slane %v1169, %v1185
        %v1187 = vlaneseq
        %v1188 = vshrl.u32 %v1187, 7
        %v1189 = vsub.s32 0, %v1188
        %v1190 = vrot.slane %v1152, %v1189
        %v1191 = vlaneseq
        %v1192 = vshrl.u32 %v1191, 7
        %v1193 = vsub.s32 0, %v1192
        %v1194 = vrot.slane %v1166, %v1193
        %v1195 = vlaneseq
        %v1196 = vshrl.u32 %v1195, 7
        %v1197 = vsub.s32 0, %v1196
        %v1198 = vrot.slane %v1168, %v1197
        %v1199 = vlaneseq
        %v1200 = vshrl.u32 %v1199, 7
        %v1201 = vsub.s32 0, %v1200
        %v1202 = vrot.slane %v1170, %v1201
        %v1211 = vmul.f32 %v1039, %v1174
        %v1212 = vmul.f32 %v1043, %v1174
        %v1213 = vmul.f32 %v1050, %v1178
        %v1214 = vmul.f32 %v1054, %v1178
        %v1215 = vmul.f32 %v1061, %v1182
        %v1216 = vmul.f32 %v1065, %v1182
        %v1217 = vmul.f32 %v1072, %v1186
        %v1218 = vmul.f32 %v1076, %v1186
        %v1219 = vmul.f32 %v1083, %v1190
        %v1220 = vmul.f32 %v1087, %v1190
        %v1221 = vmul.f32 %v1094, %v1194
        %v1222 = vmul.f32 %v1098, %v1194
        %v1223 = vmul.f32 %v1105, %v1198
        %v1224 = vmul.f32 %v1109, %v1198
        %v1225 = vmul.f32 %v1116, %v1202
        %v1226 = vmul.f32 %v1120, %v1202
        %v1227 = vmul.f32 %v1211, 0.5
        %v1228 = vmul.f32 %v1212, 0.5
        %v1229 = vmul.f32 %v1213, 0.5
        %v1230 = vmul.f32 %v1214, 0.5
        %v1231 = vmul.f32 %v1215, 0.5
        %v1232 = vmul.f32 %v1216, 0.5
        %v1233 = vmul.f32 %v1217, 0.5
        %v1234 = vmul.f32 %v1218, 0.5
        %v1235 = vmul.f32 %v1219, 0.5
        %v1236 = vmul.f32 %v1220, 0.5
        %v1237 = vmul.f32 %v1221, 0.5
        %v1238 = vmul.f32 %v1222, 0.5
        %v1239 = vmul.f32 %v1223, 0.5
        %v1240 = vmul.f32 %v1224, 0.5
        %v1241 = vmul.f32 %v1225, 0.5
        %v1242 = vmul.f32 %v1226, 0.5
        %v1243 = vtanh.pop %v1227
        %v1244 = vtanh.pop %v1228
        %v1245 = vtanh.pop %v1229
        %v1246 = vtanh.pop %v1230
        %v1247 = vtanh.pop %v1231
        %v1248 = vtanh.pop %v1232
        %v1249 = vtanh.pop %v1233
        %v1250 = vtanh.pop %v1234
        %v1251 = vtanh.pop %v1235
        %v1252 = vtanh.pop %v1236
        %v1253 = vtanh.pop %v1237
        %v1254 = vtanh.pop %v1238
        %v1255 = vtanh.pop %v1239
        %v1256 = vtanh.pop %v1240
        %v1257 = vtanh.pop %v1241
        %v1258 = vtanh.pop %v1242
        %v1259 = vmul.f32 %v1243, 0.5
        %v1260 = vmul.f32 %v1244, 0.5
        %v1261 = vmul.f32 %v1245, 0.5
        %v1262 = vmul.f32 %v1246, 0.5
        %v1263 = vmul.f32 %v1247, 0.5
        %v1264 = vmul.f32 %v1248, 0.5
        %v1265 = vmul.f32 %v1249, 0.5
        %v1266 = vmul.f32 %v1250, 0.5
        %v1267 = vmul.f32 %v1251, 0.5
        %v1268 = vmul.f32 %v1252, 0.5
        %v1269 = vmul.f32 %v1253, 0.5
        %v1270 = vmul.f32 %v1254, 0.5
        %v1271 = vmul.f32 %v1255, 0.5
        %v1272 = vmul.f32 %v1256, 0.5
        %v1273 = vmul.f32 %v1257, 0.5
        %v1274 = vmul.f32 %v1258, 0.5
        %v1275 = vadd.f32 %v1259, 0.5
        %v1276 = vadd.f32 %v1260, 0.5
        %v1277 = vadd.f32 %v1261, 0.5
        %v1278 = vadd.f32 %v1262, 0.5
        %v1279 = vadd.f32 %v1263, 0.5
        %v1280 = vadd.f32 %v1264, 0.5
        %v1281 = vadd.f32 %v1265, 0.5
        %v1282 = vadd.f32 %v1266, 0.5
        %v1283 = vadd.f32 %v1267, 0.5
        %v1284 = vadd.f32 %v1268, 0.5
        %v1285 = vadd.f32 %v1269, 0.5
        %v1286 = vadd.f32 %v1270, 0.5
        %v1287 = vadd.f32 %v1271, 0.5
        %v1288 = vadd.f32 %v1272, 0.5
        %v1289 = vadd.f32 %v1273, 0.5
        %v1290 = vadd.f32 %v1274, 0.5
        %v1291 = vmul.f32 %v1275, %v283
        %v1292 = vmul.f32 %v1276, %v284
        %v1293 = vmul.f32 %v1277, %v285
        %v1294 = vmul.f32 %v1278, %v286
        %v1295 = vmul.f32 %v1279, %v287
        %v1296 = vmul.f32 %v1280, %v288
        %v1297 = vmul.f32 %v1281, %v289
        %v1298 = vmul.f32 %v1282, %v290
        %v1299 = vmul.f32 %v1283, %v291
        %v1300 = vmul.f32 %v1284, %v292
        %v1301 = vmul.f32 %v1285, %v293
        %v1302 = vmul.f32 %v1286, %v294
        %v1303 = vmul.f32 %v1287, %v295
        %v1304 = vmul.f32 %v1288, %v296
        %v1305 = vmul.f32 %v1289, %v297
        %v1306 = vmul.f32 %v1290, %v298
        %1307 = vst.msk [vmem:[%s282] sm:$0xff] %vm299, %v1291
        %1308 = vst.msk [vmem:[%s282 + $0x8] sm:$0xff] %vm299, %v1292
        %1309 = vst.msk [vmem:[%s282 + $0x10] sm:$0xff] %vm299, %v1293
        %1310 = vst.msk [vmem:[%s282 + $0x18] sm:$0xff] %vm299, %v1294
        %1311 = vst.msk [vmem:[%s282 + $0x20] sm:$0xff] %vm299, %v1295
        %1312 = vst.msk [vmem:[%s282 + $0x28] sm:$0xff] %vm299, %v1296
        %1313 = vst.msk [vmem:[%s282 + $0x30] sm:$0xff] %vm299, %v1297
        %1314 = vst.msk [vmem:[%s282 + $0x38] sm:$0xff] %vm299, %v1298
        %1315 = vst.msk [vmem:[%s282 + $0x40] sm:$0xff] %vm299, %v1299
        %1316 = vst.msk [vmem:[%s282 + $0x48] sm:$0xff] %vm299, %v1300
        %1317 = vst.msk [vmem:[%s282 + $0x50] sm:$0xff] %vm299, %v1301
        %1318 = vst.msk [vmem:[%s282 + $0x58] sm:$0xff] %vm299, %v1302
        %1319 = vst.msk [vmem:[%s282 + $0x60] sm:$0xff] %vm299, %v1303
        %1320 = vst.msk [vmem:[%s282 + $0x68] sm:$0xff] %vm299, %v1304
        %1321 = vst.msk [vmem:[%s282 + $0x70] sm:$0xff] %vm299, %v1305
        %1322 = vst.msk [vmem:[%s282 + $0x78] sm:$0xff] %vm299, %v1306
        %s1323 = sand.u32 %s163, 1
        %s1324 = scalar_lea.sflag [#allocation4], %s1323
        %s1325 = sand.u32 %s163, 1
        %s1326 = smul.addr %s1325, 128
        %s1327 = scalar_lea.vmem [#allocation7], %s1326
        // Predicated region
        $region53: #{tpu_custom_call.1} parent=43 // pred_check
          %p1328 = pneg %p173
        $region54: #{tpu_custom_call.1} parent=43 // pred_check_branch
          %1330 = sbr.rel (%p1328) target = $region56
        $region55: #{tpu_custom_call.1} parent=43 // pred_region
          %s1332 = ssub.s32 2048, 2048
          %1333 = vsyncadd %s1324, %s1332
          %s1334 = smul.addr %s24, 16
          %s1335 = smul.addr %s1334, 128
          %s1336 = scalar_lea.hbm %s6, %s1335
          %s1337 = sshll.u32 %s1327, 4
          %s1338 = int_to_ptr.vmem [resolvable:$true] %s1337
          %1343 = dma.vmem_to_hbm [thread:$0]  %s1338, 2048, %s1336, %s1324, 128, 128, 8
        $region56: #{tpu_custom_call.1} parent=43 // pred_fallthru
          _
      $region44: #{tpu_custom_call.1} parent=5 // pred_fallthru
        _
      %p1344 = scmp.le.s32.totalorder 2, %s19
      // Predicated region
      $region57: #{tpu_custom_call.1} parent=5 // pred_check
        %p1345 = pneg %p1344
      $region58: #{tpu_custom_call.1} parent=5 // pred_check_branch
        %1347 = sbr.rel (%p1345) target = $region60
      $region59: #{tpu_custom_call.1} parent=5 // pred_region
        %s1348 = ssub.s32 %s19, 2
        // Predicated region
        $region61: #{tpu_custom_call.1} parent=59 // pred_check
          %p1349 = pneg %p179
        $region62: #{tpu_custom_call.1} parent=59 // pred_check_branch
          %1351 = sbr.rel (%p1349) target = $region64
        $region63: #{tpu_custom_call.1} parent=59 // pred_region
          %s1352 = sand.u32 %s164, 1
          %s1353 = scalar_lea.sflag [#allocation4], %s1352
          %s1354 = sand.u32 %s164, 1
          %s1355 = smul.addr %s1354, 128
          %s1356 = scalar_lea.vmem [#allocation7], %s1355
          %1357 = dma.done %s1353, 2048
        $region64: #{tpu_custom_call.1} parent=59 // pred_fallthru
          _
      $region60: #{tpu_custom_call.1} parent=5 // pred_fallthru
        _
    $region6: #{tpu_custom_call.1} parent=1 // loop_footer
      %s23 = sadd.s32 1, %s19
    $region7: #{tpu_custom_call.1} parent=1 // loop_footer_branch
      %18 = sbr.rel target = $region3
    $region8: #{tpu_custom_call.1} parent=1 // loop_exit
      _
    %1358 = vsyncpa [#allocation3], 1
    %s1359 = scalar_lea.sflag [#allocation3], 1
    %1360 = vsyncpa %s1359, 1
    %1361 = vsyncpa [#allocation6], 1
    %1362 = vsyncpa [#allocation4], 1
    %s1363 = scalar_lea.sflag [#allocation4], 1
    %1364 = vsyncpa %s1363, 1

</llo_original>
